<compile_context>
chip_gen: v6e
topology: v6e:2x2x1
jax: 0.10.0
libtpu: 0.0.40
codegen_flags: <defaults>
</compile_context>

<pallas_src>
import functools

import jax
import jax.numpy as jnp
from jax.experimental import pallas as pl
from jax.experimental.pallas import tpu as pltpu


def _round_up(v, m):
    return ((v + m - 1) // m) * m


def _vmem_budget_bytes():
    """Per-generation VMEM budget: ~75% of physical (v5e/v6e ~96 MiB, v7x ~48 MiB)."""
    try:
        cap = int(pltpu.get_tpu_info().vmem_capacity_bytes)
    except Exception:
        cap = 64 * 1024 * 1024          # conservative (v7x-sized) fallback
    return cap * 3 // 4


def _epilogue(x_new, x_old, *, min_val, max_val, max_update, round_val):
    """Per-round epilogue in f32. x_old may be None when max_update=False."""
    if max_update:
        x_new = x_old + jnp.clip(x_new - x_old, -1.0, 1.0)       # Hardtanh(-1, 1) on delta
    x = jnp.clip(x_new, float(min_val), float(max_val))          # Hardtanh(min_val, max_val)
    if round_val:
        x = jnp.floor(x + 0.5)                                   # (x + 0.5).floor()
    return x


# -----------------------------------------------------------------------------
# Path A: whole A resident in VMEM (single buffer), all rounds in one kernel.
# -----------------------------------------------------------------------------
def _gnn_resident_kernel(a_ref, x_ref, o_ref, *, n_layers, min_val, max_val,
                         max_update, round_val):
    a = a_ref[...]                       # [Npad, Npad], matmul dtype
    x = x_ref[...]                       # [Npad, Fpad], f32
    for _ in range(n_layers):            # static trip count -> fully unrolled
        x_new = jnp.dot(a, x.astype(a.dtype), preferred_element_type=jnp.float32)
        x = _epilogue(x_new, x, min_val=min_val, max_val=max_val,
                      max_update=max_update, round_val=round_val)
    o_ref[...] = x


# -----------------------------------------------------------------------------
# Path B: all rounds fused into one call; A streamed as full-K row panels.
#   x_state : persistent f32 node state (VMEM scratch, survives across rounds)
#   x_mm    : per-round snapshot of x_state in the matmul dtype (taken at i == 0,
#             so later panels of the same round still read the OLD node values)
# -----------------------------------------------------------------------------
def _gnn_tiled_fused_kernel(a_ref, x_ref, o_ref, x_state, x_mm, *, tm,
                            min_val, max_val, max_update, round_val):
    l = pl.program_id(0)                 # conv round
    i = pl.program_id(1)                 # row panel

    @pl.when((l == 0) & (i == 0))
    def _():
        x_state[...] = x_ref[...]        # seed node state from the input (fetched once)

    @pl.when(i == 0)
    def _():
        x_mm[...] = x_state[...].astype(x_mm.dtype)   # per-round matmul operand

    x_new = jnp.dot(a_ref[...], x_mm[...], preferred_element_type=jnp.float32)
    row = pl.multiple_of(i * tm, tm)
    x_old = x_state[pl.ds(row, tm), :] if max_update else None   # rows not yet overwritten
    x_act = _epilogue(x_new, x_old, min_val=min_val, max_val=max_val,
                      max_update=max_update, round_val=round_val)
    x_state[pl.ds(row, tm), :] = x_act
    o_ref[...] = x_act                   # last round's writes win in HBM


def _pick_tiled_tile(n_nodes, f_pad, asize, budget):
    """Largest full-K row-panel height whose working set fits the VMEM budget."""
    for tm in (512, 256, 128):
        n_pad = max(_round_up(n_nodes, tm), tm)
        need = (2 * tm * n_pad * asize          # A row panel, double buffered
                + 2 * n_pad * f_pad * 4         # x input buffers (fetched once)
                + n_pad * f_pad * 4             # x_state scratch (f32)
                + n_pad * f_pad * asize         # x_mm scratch
                + 2 * tm * f_pad * 4            # output block, double buffered
                + (2 << 20))                    # compiler scratch margin
        if need <= budget:
            return tm, n_pad
    tm = 128
    return tm, max(_round_up(n_nodes, tm), tm)


def net_forward(x, edge_index, edge_mask, edge_scale, pert_mask, edge_weight,
                *, min_val=0, max_val=2, n_iter=6, max_update=False,
                round_val=False, matmul_dtype=jnp.bfloat16, force_tiled=False):
    """Functional equivalent of Net.forward (classify=False path)."""
    n_nodes, n_feat = x.shape
    if n_iter <= 1:                      # no conv layers -> x returned unchanged
        return x

    # --- plain-JAX glue: edge masking, weight update, dense adjacency --------
    masked_ei = edge_index * edge_mask.astype(jnp.int32)        # masked edges -> (0, 0)
    edge_dim = edge_weight.shape[0]
    ew = edge_weight * (jnp.ones((edge_dim,), jnp.float32) - pert_mask) + pert_mask
    ew = ew * edge_scale
    src, dst = masked_ei[0], masked_ei[1]

    f_pad = max(_round_up(n_feat, 128), 128)     # full-lane (unmasked) output stores
    n0 = max(_round_up(n_nodes, 128), 128)       # smallest legal node padding

    # A[dst, src] += w   =>   (A @ x)[i] = sum_{e: dst[e]=i} w[e] * x[src[e]]
    # f32 scatter-add keeps the masked-edge pile-up at A[0,0] exact, then cast once.
    adj0 = jnp.zeros((n0, n0), jnp.float32).at[dst, src].add(ew).astype(matmul_dtype)
    asize = jnp.dtype(matmul_dtype).itemsize

    n_layers = n_iter - 1
    epi = dict(min_val=min_val, max_val=max_val, max_update=max_update,
               round_val=round_val)
    budget = _vmem_budget_bytes()

    a_bytes0 = n0 * n0 * asize
    x_bytes0 = n0 * f_pad * 4
    # Resident footprint: single-buffered A + x_in + x_out + unrolled-loop temps.
    resident_need = a_bytes0 + 6 * x_bytes0 + (2 << 20)
    use_resident = (not force_tiled) and (resident_need <= budget)

    if use_resident:
        # Gridless call: each operand is copied HBM->VMEM exactly once (no double
        # buffer), A is read from HBM once for all (n_iter-1) rounds.
        n_pad = n0
        x_pad = jnp.zeros((n_pad, f_pad), jnp.float32).at[:n_nodes, :n_feat].set(
            x.astype(jnp.float32))
        kernel = functools.partial(_gnn_resident_kernel, n_layers=n_layers, **epi)
        out_pad = pl.pallas_call(
            kernel,
            out_shape=jax.ShapeDtypeStruct((n_pad, f_pad), jnp.float32),
            in_specs=[pl.BlockSpec(memory_space=pltpu.MemorySpace.VMEM),
                      pl.BlockSpec(memory_space=pltpu.MemorySpace.VMEM)],
            out_specs=pl.BlockSpec(memory_space=pltpu.MemorySpace.VMEM),
            compiler_params=pltpu.CompilerParams(vmem_limit_bytes=budget),
            cost_estimate=pl.CostEstimate(
                flops=2 * n_pad * n_pad * f_pad * n_layers,
                transcendentals=0,
                bytes_accessed=a_bytes0 + 2 * x_bytes0,
            ),
        )(adj0, x_pad)
    else:
        # Fused tiled path: one call for all rounds; only A is streamed per round.
        # The row axis must stay "arbitrary": the node-state scratch is per-core,
        # and the path is HBM-bound on A anyway (bandwidth is shared across TCs).
        tm, n_pad = _pick_tiled_tile(n_nodes, f_pad, asize, budget)
        adj = adj0 if n_pad == n0 else jnp.pad(adj0, ((0, n_pad - n0), (0, n_pad - n0)))
        x_pad = jnp.zeros((n_pad, f_pad), jnp.float32).at[:n_nodes, :n_feat].set(
            x.astype(jnp.float32))
        a_bytes = n_pad * n_pad * asize
        x_bytes = n_pad * f_pad * 4
        kernel = functools.partial(_gnn_tiled_fused_kernel, tm=tm, **epi)
        out_pad = pl.pallas_call(
            kernel,
            out_shape=jax.ShapeDtypeStruct((n_pad, f_pad), jnp.float32),
            grid_spec=pltpu.PrefetchScalarGridSpec(
                num_scalar_prefetch=0,
                grid=(n_layers, n_pad // tm),
                in_specs=[
                    pl.BlockSpec((tm, n_pad), lambda l, i: (i, 0)),     # A row panel
                    pl.BlockSpec((n_pad, f_pad), lambda l, i: (0, 0)),  # x (fetched once)
                ],
                out_specs=pl.BlockSpec((tm, f_pad), lambda l, i: (i, 0)),
                scratch_shapes=[
                    pltpu.VMEM((n_pad, f_pad), jnp.float32),            # x_state
                    pltpu.VMEM((n_pad, f_pad), matmul_dtype),           # x_mm
                ],
            ),
            compiler_params=pltpu.CompilerParams(
                dimension_semantics=("arbitrary", "arbitrary"),
                vmem_limit_bytes=budget,
            ),
            cost_estimate=pl.CostEstimate(
                flops=2 * n_pad * n_pad * f_pad * n_layers,
                transcendentals=0,
                bytes_accessed=n_layers * a_bytes + (n_layers + 1) * x_bytes,
            ),
        )(adj, x_pad)

    return out_pad[:n_nodes, :n_feat]


# -----------------------------------------------------------------------------
# References for validation
# -----------------------------------------------------------------------------
def _reference_forward(x, edge_index, edge_mask, edge_scale, pert_mask,
                       edge_weight, *, min_val=0, max_val=2, n_iter=6,
                       max_update=False, round_val=False):
    """Pure-JAX edge-for-edge reference, f32 throughout (mirrors PyTorch)."""
    masked_ei = edge_index * edge_mask.astype(jnp.int32)
    ew = edge_weight * (jnp.ones_like(edge_weight) - pert_mask) + pert_mask
    ew = ew * edge_scale
    src, dst = masked_ei[0], masked_ei[1]
    x = x.astype(jnp.float32)
    for _ in range(n_iter - 1):
        msgs = ew[:, None] * x[src]                       # [E, F]
        x_new = jnp.zeros_like(x).at[dst].add(msgs)       # scatter-sum
        x = _epilogue(x_new, x, min_val=min_val, max_val=max_val,
                      max_update=max_update, round_val=round_val)
    return x


def _reference_forward_dense(x, edge_index, edge_mask, edge_scale, pert_mask,
                             edge_weight, *, min_val=0, max_val=2, n_iter=6,
                             max_update=False, round_val=False,
                             matmul_dtype=jnp.bfloat16):
    """Dense-A reference with the same per-round quantization as the kernel."""
    n_nodes = x.shape[0]
    masked_ei = edge_index * edge_mask.astype(jnp.int32)
    ew = edge_weight * (jnp.ones_like(edge_weight) - pert_mask) + pert_mask
    ew = ew * edge_scale
    src, dst = masked_ei[0], masked_ei[1]
    adj = jnp.zeros((n_nodes, n_nodes), jnp.float32).at[dst, src].add(ew)
    adj = adj.astype(matmul_dtype).astype(jnp.float32)
    x = x.astype(jnp.float32)
    for _ in range(n_iter - 1):
        x_q = x.astype(matmul_dtype).astype(jnp.float32)
        x_new = jnp.dot(adj, x_q, precision=jax.lax.Precision.HIGHEST)
        x_old = x if max_update else None
        x = _epilogue(x_new, x_old, min_val=min_val, max_val=max_val,
                      max_update=max_update, round_val=round_val)
    return x


def _make_graph(key, n_nodes, n_feat, n_edges):
    k_x, k_src, k_dst, k_mask, k_scale, k_pert = jax.random.split(key, 6)
    x = jax.random.uniform(k_x, (n_nodes, n_feat), jnp.float32, 0.0, 2.0)
    edge_index = jnp.stack([
        jax.random.randint(k_src, (n_edges,), 0, n_nodes),
        jax.random.randint(k_dst, (n_edges,), 0, n_nodes),
    ]).astype(jnp.int32)
    edge_mask = (jax.random.uniform(k_mask, (n_edges,)) > 0.2).astype(jnp.float32)
    edge_scale = jax.random.uniform(k_scale, (n_edges,), jnp.float32, 0.5, 1.5)
    pert_mask = (jax.random.uniform(k_pert, (n_edges,)) > 0.8).astype(jnp.float32)
    edge_weight = jnp.ones((n_edges,), jnp.float32)   # torch.ones(edge_dim) parameter
    return x, edge_index, edge_mask, edge_scale, pert_mask, edge_weight


if __name__ == "__main__":
    key = jax.random.PRNGKey(0)
    k1, k2 = jax.random.split(key)
    base = dict(min_val=0, max_val=2)

    # -------- Demo 1: small graph -> VMEM-resident path (A read once) ----------
    N1, F1, E1 = 32, 8, 64
    args1 = _make_graph(k1, N1, F1, E1)

    # (a) f32 MXU path, full 5 rounds (incl. max_update) vs. edge-for-edge ref.
    for mu in (False, True):
        out_f32 = jax.block_until_ready(
            net_forward(*args1, **base, n_iter=6, max_update=mu,
                        matmul_dtype=jnp.float32))
        ref_f32 = _reference_forward(*args1, **base, n_iter=6, max_update=mu)
        assert out_f32.shape == (N1, F1)
        assert jnp.allclose(out_f32, ref_f32, atol=1e-3, rtol=1e-3), \
            "f32 resident path mismatch (max_update=%s)" % mu

    # (b) bf16 MXU path, single round, vs. quantization-matched dense reference.
    out_bf16 = jax.block_until_ready(
        net_forward(*args1, **base, n_iter=2, matmul_dtype=jnp.bfloat16))
    ref_bf16 = _reference_forward_dense(*args1, **base, n_iter=2,
                                        matmul_dtype=jnp.bfloat16)
    assert jnp.allclose(out_bf16, ref_bf16, atol=1e-3, rtol=1e-3), \
        "bf16 resident path mismatch"

    # -------- Demo 2: larger graph -> forced fused tiled/pipelined path --------
    N2, F2, E2 = 600, 8, 2048
    args2 = _make_graph(k2, N2, F2, E2)

    # (c) fused tiled path, single round, bf16, vs. quantization-matched ref.
    out_t1 = jax.block_until_ready(
        net_forward(*args2, **base, n_iter=2, matmul_dtype=jnp.bfloat16,
                    force_tiled=True))
    ref_t1 = _reference_forward_dense(*args2, **base, n_iter=2,
                                      matmul_dtype=jnp.bfloat16)
    assert out_t1.shape == (N2, F2)
    assert jnp.allclose(out_t1, ref_t1, atol=1e-3, rtol=1e-3), "tiled path mismatch"

    # (d) fused tiled path, full 5 rounds in ONE kernel: sanity + range check.
    out_t5 = jax.block_until_ready(
        net_forward(*args2, **base, n_iter=6, matmul_dtype=jnp.bfloat16,
                    force_tiled=True))
    assert out_t5.shape == (N2, F2)
    assert bool(jnp.isfinite(out_t5).all())
    assert bool((out_t5 >= 0.0).all()) and bool((out_t5 <= 2.0).all())

    # (e) auto path (resident, per-generation budget) agrees with the tiled path.
    out_r5 = jax.block_until_ready(
        net_forward(*args2, **base, n_iter=6, matmul_dtype=jnp.bfloat16))
    assert jnp.allclose(out_r5, out_t5, atol=1e-2, rtol=1e-2), \
        "resident vs tiled disagreement"

    print("KERNEL_OK")
</pallas_src>

<mosaic_0001>
module attributes {stable_mosaic.version = 11 : i64} {
  func.func @_gnn_resident_kernel(%arg0: memref<128x128xf32, #tpu.memory_space<vmem>>, %arg1: memref<128x128xf32, #tpu.memory_space<vmem>>, %arg2: memref<128x128xf32, #tpu.memory_space<vmem>>) attributes {dimension_semantics = [], scalar_prefetch = 0 : i64, scratch_operands = 0 : i64, tpu.core_type = #tpu.core_type<tc>} {
    %c0 = arith.constant 0 : index
    %c0_0 = arith.constant 0 : index
    %0 = vector.load %arg0[%c0, %c0_0] : memref<128x128xf32, #tpu.memory_space<vmem>>, vector<128x128xf32>
    %c0_1 = arith.constant 0 : index
    %c0_2 = arith.constant 0 : index
    %1 = vector.load %arg1[%c0_1, %c0_2] : memref<128x128xf32, #tpu.memory_space<vmem>>, vector<128x128xf32>
    %cst = arith.constant dense<0.000000e+00> : vector<128x128xf32>
    %2 = tpu.matmul %0, %1, %cst {dimension_numbers = #tpu.dot_dimension_numbers<[1], [0], [0], [1], [0, 0, 1, 1], [], []>} : vector<128x128xf32>, vector<128x128xf32>, vector<128x128xf32> -> vector<128x128xf32>
    %cst_3 = arith.constant 0.000000e+00 : f32
    %cst_4 = arith.constant 2.000000e+00 : f32
    %3 = vector.broadcast %cst_3 : f32 to vector<128x128xf32>
    %4 = arith.maximumf %3, %2 : vector<128x128xf32>
    %5 = vector.broadcast %cst_4 : f32 to vector<128x128xf32>
    %6 = arith.minimumf %5, %4 : vector<128x128xf32>
    %cst_5 = arith.constant dense<0.000000e+00> : vector<128x128xf32>
    %7 = tpu.matmul %0, %6, %cst_5 {dimension_numbers = #tpu.dot_dimension_numbers<[1], [0], [0], [1], [0, 0, 1, 1], [], []>} : vector<128x128xf32>, vector<128x128xf32>, vector<128x128xf32> -> vector<128x128xf32>
    %cst_6 = arith.constant 0.000000e+00 : f32
    %cst_7 = arith.constant 2.000000e+00 : f32
    %8 = vector.broadcast %cst_6 : f32 to vector<128x128xf32>
    %9 = arith.maximumf %8, %7 : vector<128x128xf32>
    %10 = vector.broadcast %cst_7 : f32 to vector<128x128xf32>
    %11 = arith.minimumf %10, %9 : vector<128x128xf32>
    %cst_8 = arith.constant dense<0.000000e+00> : vector<128x128xf32>
    %12 = tpu.matmul %0, %11, %cst_8 {dimension_numbers = #tpu.dot_dimension_numbers<[1], [0], [0], [1], [0, 0, 1, 1], [], []>} : vector<128x128xf32>, vector<128x128xf32>, vector<128x128xf32> -> vector<128x128xf32>
    %cst_9 = arith.constant 0.000000e+00 : f32
    %cst_10 = arith.constant 2.000000e+00 : f32
    %13 = vector.broadcast %cst_9 : f32 to vector<128x128xf32>
    %14 = arith.maximumf %13, %12 : vector<128x128xf32>
    %15 = vector.broadcast %cst_10 : f32 to vector<128x128xf32>
    %16 = arith.minimumf %15, %14 : vector<128x128xf32>
    %cst_11 = arith.constant dense<0.000000e+00> : vector<128x128xf32>
    %17 = tpu.matmul %0, %16, %cst_11 {dimension_numbers = #tpu.dot_dimension_numbers<[1], [0], [0], [1], [0, 0, 1, 1], [], []>} : vector<128x128xf32>, vector<128x128xf32>, vector<128x128xf32> -> vector<128x128xf32>
    %cst_12 = arith.constant 0.000000e+00 : f32
    %cst_13 = arith.constant 2.000000e+00 : f32
    %18 = vector.broadcast %cst_12 : f32 to vector<128x128xf32>
    %19 = arith.maximumf %18, %17 : vector<128x128xf32>
    %20 = vector.broadcast %cst_13 : f32 to vector<128x128xf32>
    %21 = arith.minimumf %20, %19 : vector<128x128xf32>
    %cst_14 = arith.constant dense<0.000000e+00> : vector<128x128xf32>
    %22 = tpu.matmul %0, %21, %cst_14 {dimension_numbers = #tpu.dot_dimension_numbers<[1], [0], [0], [1], [0, 0, 1, 1], [], []>} : vector<128x128xf32>, vector<128x128xf32>, vector<128x128xf32> -> vector<128x128xf32>
    %cst_15 = arith.constant 0.000000e+00 : f32
    %cst_16 = arith.constant 2.000000e+00 : f32
    %23 = vector.broadcast %cst_15 : f32 to vector<128x128xf32>
    %24 = arith.maximumf %23, %22 : vector<128x128xf32>
    %25 = vector.broadcast %cst_16 : f32 to vector<128x128xf32>
    %26 = arith.minimumf %25, %24 : vector<128x128xf32>
    %c0_17 = arith.constant 0 : index
    %c0_18 = arith.constant 0 : index
    %27 = vector.load %arg2[%c0_17, %c0_18] : memref<128x128xf32, #tpu.memory_space<vmem>>, vector<128x128xf32>
    tpu.vector_store %arg2[%c0_17, %c0_18], %26 {strides = array<i32>} : memref<128x128xf32, #tpu.memory_space<vmem>>, vector<128x128xf32>,
    return
  }
}

</mosaic_0001>

<llo_original>
// kernel: tpu_custom_call.1
$region0: #{tpu_custom_call.1}
  #allocation0 [shape = 'u32[]', space=smem, size = 0x4, offset = 0x4, fixed_abs, tag = 'smem constant byte address 0x4 - core index']
  #allocation1 [shape = 'u32[144,128]{1,0:T(1,128)}', space=vmem, size = 0x12000, scoped, tag = 'internal scratch']
  %s0 = inlined_call_operand.hbm [shape: f32[128,128], index: 0, kind: input, shape index: {}]
  %s1 = inlined_call_operand.hbm [shape: f32[128,128], index: 1, kind: input, shape index: {}]
  %s2 = inlined_call_operand.hbm [shape: f32[128,128], index: 2, kind: output, shape index: {}]
  %s3 = sld [smem:[#allocation0]]
  $region26: #{tpu_custom_call.1} parent=0
    _
  %s5 = ssub.s32 1, %s3
  %s6 = scalar_select 0, %s5, %s3
  $region1: #{tpu_custom_call.1} parent=0
    #allocation2 [shape = 'u8[65536]{0}', space=vmem, size = 0x10000, scoped, tag = 'input window, operand 0, single buffered']
    #allocation3 [shape = 's32[1]{0}', space=sflag, size = 0x4, scoped, tag = 'scoped memory for tpu_custom_call.1']
    #allocation4 [shape = 's32[1]{0}', space=sflag, size = 0x4, scoped, tag = 'scoped memory for tpu_custom_call.1']
    #allocation5 [shape = 'u8[65536]{0}', space=vmem, size = 0x10000, scoped, tag = 'input window, operand 1, single buffered']
    #allocation6 [shape = 's32[1]{0}', space=sflag, size = 0x4, scoped, tag = 'scoped memory for tpu_custom_call.1']
    #allocation7 [shape = 'u8[65536]{0}', space=vmem, size = 0x10000, scoped, tag = 'output window, operand 0, single buffered']
    %7 = vsyncpa [#allocation3], 0
    %8 = vsyncpa [#allocation6], 0
    %9 = vsyncpa [#allocation4], 0
    // Predicated region
    $region2: #{tpu_custom_call.1} parent=1 // pred_check
      _
    $region3: #{tpu_custom_call.1} parent=1 // pred_check_branch
      %11 = sbr.rel (0) target = $region5
    $region4: #{tpu_custom_call.1} parent=1 // pred_region
      %s13 = ssub.s32 2048, 2048
      %14 = vsyncadd [#allocation3], %s13
      %s15 = sshll.u32 [#allocation2], 4
      %s16 = int_to_ptr.vmem [resolvable:$true] %s15
      %21 = dma.hbm_to_vmem [thread:$0]  %s0, 2048, %s16, [#allocation3], 128, 128, 8
    $region5: #{tpu_custom_call.1} parent=1 // pred_fallthru
      _
    // Predicated region
    $region6: #{tpu_custom_call.1} parent=1 // pred_check
      _
    $region7: #{tpu_custom_call.1} parent=1 // pred_check_branch
      %23 = sbr.rel (0) target = $region9
    $region8: #{tpu_custom_call.1} parent=1 // pred_region
      %s25 = ssub.s32 2048, 2048
      %26 = vsyncadd [#allocation6], %s25
      %s27 = sshll.u32 [#allocation5], 4
      %s28 = int_to_ptr.vmem [resolvable:$true] %s27
      %33 = dma.hbm_to_vmem [thread:$0]  %s1, 2048, %s28, [#allocation6], 128, 128, 8
    $region9: #{tpu_custom_call.1} parent=1 // pred_fallthru
      _
    // Predicated region
    $region10: #{tpu_custom_call.1} parent=1 // pred_check
      _
    $region11: #{tpu_custom_call.1} parent=1 // pred_check_branch
      %35 = sbr.rel (0) target = $region13
    $region12: #{tpu_custom_call.1} parent=1 // pred_region
      %36 = dma.done [#allocation3], 2048
    $region13: #{tpu_custom_call.1} parent=1 // pred_fallthru
      _
    // Predicated region
    $region14: #{tpu_custom_call.1} parent=1 // pred_check
      _
    $region15: #{tpu_custom_call.1} parent=1 // pred_check_branch
      %38 = sbr.rel (0) target = $region17
    $region16: #{tpu_custom_call.1} parent=1 // pred_region
      %39 = dma.done [#allocation6], 2048
    $region17: #{tpu_custom_call.1} parent=1 // pred_fallthru
      _
    %v40 = vld [vmem:[#allocation2] sm:$0xff]
    %v41 = vld [vmem:[#allocation2 + $0x8] sm:$0xff]
    %v42 = vld [vmem:[#allocation2 + $0x10] sm:$0xff]
    %v43 = vld [vmem:[#allocation2 + $0x18] sm:$0xff]
    %v44 = vld [vmem:[#allocation2 + $0x20] sm:$0xff]
    %v45 = vld [vmem:[#allocation2 + $0x28] sm:$0xff]
    %v46 = vld [vmem:[#allocation2 + $0x30] sm:$0xff]
    %v47 = vld [vmem:[#allocation2 + $0x38] sm:$0xff]
    %v48 = vld [vmem:[#allocation2 + $0x40] sm:$0xff]
    %v49 = vld [vmem:[#allocation2 + $0x48] sm:$0xff]
    %v50 = vld [vmem:[#allocation2 + $0x50] sm:$0xff]
    %v51 = vld [vmem:[#allocation2 + $0x58] sm:$0xff]
    %v52 = vld [vmem:[#allocation2 + $0x60] sm:$0xff]
    %v53 = vld [vmem:[#allocation2 + $0x68] sm:$0xff]
    %v54 = vld [vmem:[#allocation2 + $0x70] sm:$0xff]
    %v55 = vld [vmem:[#allocation2 + $0x78] sm:$0xff]
    %v56 = vld [vmem:[#allocation5] sm:$0xff]
    %v57 = vld [vmem:[#allocation5 + $0x8] sm:$0xff]
    %v58 = vld [vmem:[#allocation5 + $0x10] sm:$0xff]
    %v59 = vld [vmem:[#allocation5 + $0x18] sm:$0xff]
    %v60 = vld [vmem:[#allocation5 + $0x20] sm:$0xff]
    %v61 = vld [vmem:[#allocation5 + $0x28] sm:$0xff]
    %v62 = vld [vmem:[#allocation5 + $0x30] sm:$0xff]
    %v63 = vld [vmem:[#allocation5 + $0x38] sm:$0xff]
    %v64 = vld [vmem:[#allocation5 + $0x40] sm:$0xff]
    %v65 = vld [vmem:[#allocation5 + $0x48] sm:$0xff]
    %v66 = vld [vmem:[#allocation5 + $0x50] sm:$0xff]
    %v67 = vld [vmem:[#allocation5 + $0x58] sm:$0xff]
    %v68 = vld [vmem:[#allocation5 + $0x60] sm:$0xff]
    %v69 = vld [vmem:[#allocation5 + $0x68] sm:$0xff]
    %v70 = vld [vmem:[#allocation5 + $0x70] sm:$0xff]
    %v71 = vld [vmem:[#allocation5 + $0x78] sm:$0xff]
    %72 = vmatprep.subr.mxu0 0.0
    %73 = vmatpush1.msra.mxu0 %v71
    %74 = vmatprep.subr.mxu0 0.0
    %75 = vmatpush1.msra.mxu0 %v70
    %76 = vmatprep.subr.mxu0 0.0
    %77 = vmatpush1.msra.mxu0 %v69
    %78 = vmatprep.subr.mxu0 0.0
    %79 = vmatpush1.msra.mxu0 %v68
    %80 = vmatprep.subr.mxu0 0.0
    %81 = vmatpush1.msra.mxu0 %v67
    %82 = vmatprep.subr.mxu0 0.0
    %83 = vmatpush1.msra.mxu0 %v66
    %84 = vmatprep.subr.mxu0 0.0
    %85 = vmatpush1.msra.mxu0 %v65
    %86 = vmatprep.subr.mxu0 0.0
    %87 = vmatpush1.msra.mxu0 %v64
    %88 = vmatprep.subr.mxu0 0.0
    %89 = vmatpush1.msra.mxu0 %v63
    %90 = vmatprep.subr.mxu0 0.0
    %91 = vmatpush1.msra.mxu0 %v62
    %92 = vmatprep.subr.mxu0 0.0
    %93 = vmatpush1.msra.mxu0 %v61
    %94 = vmatprep.subr.mxu0 0.0
    %95 = vmatpush1.msra.mxu0 %v60
    %96 = vmatprep.subr.mxu0 0.0
    %97 = vmatpush1.msra.mxu0 %v59
    %98 = vmatprep.subr.mxu0 0.0
    %99 = vmatpush1.msra.mxu0 %v58
    %100 = vmatprep.subr.mxu0 0.0
    %101 = vmatpush1.msra.mxu0 %v57
    %102 = vmatprep.subr.mxu0 0.0
    %103 = vmatpush1.msra.mxu0 %v56
    %104 = vmatprep.subr.mxu0 0.0
    %105 = vmatpush2.msra.mxu0 0.0
    %106 = vmatprep.subr.mxu0 0.0
    %107 = vmatpush2.msra.mxu0 0.0
    %108 = vmatprep.subr.mxu0 0.0
    %109 = vmatpush2.msra.mxu0 0.0
    %110 = vmatprep.subr.mxu0 0.0
    %111 = vmatpush2.msra.mxu0 0.0
    %112 = vmatprep.subr.mxu0 0.0
    %113 = vmatpush2.msra.mxu0 0.0
    %114 = vmatprep.subr.mxu0 0.0
    %115 = vmatpush2.msra.mxu0 0.0
    %116 = vmatprep.subr.mxu0 0.0
    %117 = vmatpush2.msra.mxu0 0.0
    %118 = vmatprep.subr.mxu0 0.0
    %119 = vmatpush2.msra.mxu0 0.0
    %120 = vmatprep.subr.mxu0 0.0
    %121 = vmatpush2.msra.mxu0 0.0
    %122 = vmatprep.subr.mxu0 0.0
    %123 = vmatpush2.msra.mxu0 0.0
    %124 = vmatprep.subr.mxu0 0.0
    %125 = vmatpush2.msra.mxu0 0.0
    %126 = vmatprep.subr.mxu0 0.0
    %127 = vmatpush2.msra.mxu0 0.0
    %128 = vmatprep.subr.mxu0 0.0
    %129 = vmatpush2.msra.mxu0 0.0
    %130 = vmatprep.subr.mxu0 0.0
    %131 = vmatpush2.msra.mxu0 0.0
    %132 = vmatprep.subr.mxu0 0.0
    %133 = vmatpush2.msra.mxu0 0.0
    %134 = vmatprep.subr.mxu0 0.0
    %135 = vmatpush2.msra.mxu0 0.0
    %136 = vmatprep.mubr.f32.mxu0 0.0
    %137 = vmatmul.mubr.f32.gmra.mxu0 %v40
    %v138 = vpop.f32.mrf.mxu0
    %v139 = vadd.f32 0.0, %v138
    %v140 = vpop.f32.mrf.mxu0
    %141 = vmatprep.mubr.f32.mxu0 0.0
    %142 = vmatmul.mubr.f32.gmra.mxu0 %v41
    %v143 = vpop.f32.mrf.mxu0
    %v144 = vadd.f32 0.0, %v143
    %v145 = vpop.f32.mrf.mxu0
    %146 = vmatprep.mubr.f32.mxu0 0.0
    %147 = vmatmul.mubr.f32.gmra.mxu0 %v42
    %v148 = vpop.f32.mrf.mxu0
    %v149 = vadd.f32 0.0, %v148
    %v150 = vpop.f32.mrf.mxu0
    %151 = vmatprep.mubr.f32.mxu0 0.0
    %152 = vmatmul.mubr.f32.gmra.mxu0 %v43
    %v153 = vpop.f32.mrf.mxu0
    %v154 = vadd.f32 0.0, %v153
    %v155 = vpop.f32.mrf.mxu0
    %156 = vmatprep.mubr.f32.mxu0 0.0
    %157 = vmatmul.mubr.f32.gmra.mxu0 %v44
    %v158 = vpop.f32.mrf.mxu0
    %v159 = vadd.f32 0.0, %v158
    %v160 = vpop.f32.mrf.mxu0
    %161 = vmatprep.mubr.f32.mxu0 0.0
    %162 = vmatmul.mubr.f32.gmra.mxu0 %v45
    %v163 = vpop.f32.mrf.mxu0
    %v164 = vadd.f32 0.0, %v163
    %v165 = vpop.f32.mrf.mxu0
    %166 = vmatprep.mubr.f32.mxu0 0.0
    %167 = vmatmul.mubr.f32.gmra.mxu0 %v46
    %v168 = vpop.f32.mrf.mxu0
    %v169 = vadd.f32 0.0, %v168
    %v170 = vpop.f32.mrf.mxu0
    %171 = vmatprep.mubr.f32.mxu0 0.0
    %172 = vmatmul.mubr.f32.gmra.mxu0 %v47
    %v173 = vpop.f32.mrf.mxu0
    %v174 = vadd.f32 0.0, %v173
    %v175 = vpop.f32.mrf.mxu0
    %176 = vmatprep.mubr.f32.mxu0 0.0
    %177 = vmatmul.mubr.f32.gmra.mxu0 %v48
    %v178 = vpop.f32.mrf.mxu0
    %v179 = vadd.f32 0.0, %v178
    %v180 = vpop.f32.mrf.mxu0
    %181 = vmatprep.mubr.f32.mxu0 0.0
    %182 = vmatmul.mubr.f32.gmra.mxu0 %v49
    %v183 = vpop.f32.mrf.mxu0
    %v184 = vadd.f32 0.0, %v183
    %v185 = vpop.f32.mrf.mxu0
    %186 = vmatprep.mubr.f32.mxu0 0.0
    %187 = vmatmul.mubr.f32.gmra.mxu0 %v50
    %v188 = vpop.f32.mrf.mxu0
    %v189 = vadd.f32 0.0, %v188
    %v190 = vpop.f32.mrf.mxu0
    %191 = vmatprep.mubr.f32.mxu0 0.0
    %192 = vmatmul.mubr.f32.gmra.mxu0 %v51
    %v193 = vpop.f32.mrf.mxu0
    %v194 = vadd.f32 0.0, %v193
    %v195 = vpop.f32.mrf.mxu0
    %196 = vmatprep.mubr.f32.mxu0 0.0
    %197 = vmatmul.mubr.f32.gmra.mxu0 %v52
    %v198 = vpop.f32.mrf.mxu0
    %v199 = vadd.f32 0.0, %v198
    %v200 = vpop.f32.mrf.mxu0
    %201 = vmatprep.mubr.f32.mxu0 0.0
    %202 = vmatmul.mubr.f32.gmra.mxu0 %v53
    %v203 = vpop.f32.mrf.mxu0
    %v204 = vadd.f32 0.0, %v203
    %v205 = vpop.f32.mrf.mxu0
    %206 = vmatprep.mubr.f32.mxu0 0.0
    %207 = vmatmul.mubr.f32.gmra.mxu0 %v54
    %v208 = vpop.f32.mrf.mxu0
    %v209 = vadd.f32 0.0, %v208
    %v210 = vpop.f32.mrf.mxu0
    %211 = vmatprep.mubr.f32.mxu0 0.0
    %212 = vmatmul.mubr.f32.gmra.mxu0 %v55
    %v213 = vpop.f32.mrf.mxu0
    %v214 = vadd.f32 0.0, %v213
    %v215 = vpop.f32.mrf.mxu0
    %216 = vdwg.mxu0
    %v217 = vmax.f32 %v139, 0.0
    %v218 = vmax.f32 %v144, 0.0
    %v219 = vmax.f32 %v149, 0.0
    %v220 = vmax.f32 %v154, 0.0
    %v221 = vmax.f32 %v159, 0.0
    %v222 = vmax.f32 %v164, 0.0
    %v223 = vmax.f32 %v169, 0.0
    %v224 = vmax.f32 %v174, 0.0
    %v225 = vmax.f32 %v179, 0.0
    %v226 = vmax.f32 %v184, 0.0
    %v227 = vmax.f32 %v189, 0.0
    %v228 = vmax.f32 %v194, 0.0
    %v229 = vmax.f32 %v199, 0.0
    %v230 = vmax.f32 %v204, 0.0
    %v231 = vmax.f32 %v209, 0.0
    %v232 = vmax.f32 %v214, 0.0
    %v233 = vmin.f32 %v217, 2.0
    %v234 = vmin.f32 %v218, 2.0
    %v235 = vmin.f32 %v219, 2.0
    %v236 = vmin.f32 %v220, 2.0
    %v237 = vmin.f32 %v221, 2.0
    %v238 = vmin.f32 %v222, 2.0
    %v239 = vmin.f32 %v223, 2.0
    %v240 = vmin.f32 %v224, 2.0
    %v241 = vmin.f32 %v225, 2.0
    %v242 = vmin.f32 %v226, 2.0
    %v243 = vmin.f32 %v227, 2.0
    %v244 = vmin.f32 %v228, 2.0
    %v245 = vmin.f32 %v229, 2.0
    %v246 = vmin.f32 %v230, 2.0
    %v247 = vmin.f32 %v231, 2.0
    %v248 = vmin.f32 %v232, 2.0
    %249 = vmatprep.subr.mxu0 0.0
    %250 = vmatpush1.msra.mxu0 %v248
    %251 = vmatprep.subr.mxu0 0.0
    %252 = vmatpush1.msra.mxu0 %v247
    %253 = vmatprep.subr.mxu0 0.0
    %254 = vmatpush1.msra.mxu0 %v246
    %255 = vmatprep.subr.mxu0 0.0
    %256 = vmatpush1.msra.mxu0 %v245
    %257 = vmatprep.subr.mxu0 0.0
    %258 = vmatpush1.msra.mxu0 %v244
    %259 = vmatprep.subr.mxu0 0.0
    %260 = vmatpush1.msra.mxu0 %v243
    %261 = vmatprep.subr.mxu0 0.0
    %262 = vmatpush1.msra.mxu0 %v242
    %263 = vmatprep.subr.mxu0 0.0
    %264 = vmatpush1.msra.mxu0 %v241
    %265 = vmatprep.subr.mxu0 0.0
    %266 = vmatpush1.msra.mxu0 %v240
    %267 = vmatprep.subr.mxu0 0.0
    %268 = vmatpush1.msra.mxu0 %v239
    %269 = vmatprep.subr.mxu0 0.0
    %270 = vmatpush1.msra.mxu0 %v238
    %271 = vmatprep.subr.mxu0 0.0
    %272 = vmatpush1.msra.mxu0 %v237
    %273 = vmatprep.subr.mxu0 0.0
    %274 = vmatpush1.msra.mxu0 %v236
    %275 = vmatprep.subr.mxu0 0.0
    %276 = vmatpush1.msra.mxu0 %v235
    %277 = vmatprep.subr.mxu0 0.0
    %278 = vmatpush1.msra.mxu0 %v234
    %279 = vmatprep.subr.mxu0 0.0
    %280 = vmatpush1.msra.mxu0 %v233
    %281 = vmatprep.subr.mxu0 0.0
    %282 = vmatpush2.msra.mxu0 0.0
    %283 = vmatprep.subr.mxu0 0.0
    %284 = vmatpush2.msra.mxu0 0.0
    %285 = vmatprep.subr.mxu0 0.0
    %286 = vmatpush2.msra.mxu0 0.0
    %287 = vmatprep.subr.mxu0 0.0
    %288 = vmatpush2.msra.mxu0 0.0
    %289 = vmatprep.subr.mxu0 0.0
    %290 = vmatpush2.msra.mxu0 0.0
    %291 = vmatprep.subr.mxu0 0.0
    %292 = vmatpush2.msra.mxu0 0.0
    %293 = vmatprep.subr.mxu0 0.0
    %294 = vmatpush2.msra.mxu0 0.0
    %295 = vmatprep.subr.mxu0 0.0
    %296 = vmatpush2.msra.mxu0 0.0
    %297 = vmatprep.subr.mxu0 0.0
    %298 = vmatpush2.msra.mxu0 0.0
    %299 = vmatprep.subr.mxu0 0.0
    %300 = vmatpush2.msra.mxu0 0.0
    %301 = vmatprep.subr.mxu0 0.0
    %302 = vmatpush2.msra.mxu0 0.0
    %303 = vmatprep.subr.mxu0 0.0
    %304 = vmatpush2.msra.mxu0 0.0
    %305 = vmatprep.subr.mxu0 0.0
    %306 = vmatpush2.msra.mxu0 0.0
    %307 = vmatprep.subr.mxu0 0.0
    %308 = vmatpush2.msra.mxu0 0.0
    %309 = vmatprep.subr.mxu0 0.0
    %310 = vmatpush2.msra.mxu0 0.0
    %311 = vmatprep.subr.mxu0 0.0
    %312 = vmatpush2.msra.mxu0 0.0
    %313 = vmatprep.mubr.f32.mxu0 0.0
    %314 = vmatmul.mubr.f32.gmra.mxu0 %v40
    %v315 = vpop.f32.mrf.mxu0
    %v316 = vadd.f32 0.0, %v315
    %v317 = vpop.f32.mrf.mxu0
    %318 = vmatprep.mubr.f32.mxu0 0.0
    %319 = vmatmul.mubr.f32.gmra.mxu0 %v41
    %v320 = vpop.f32.mrf.mxu0
    %v321 = vadd.f32 0.0, %v320
    %v322 = vpop.f32.mrf.mxu0
    %323 = vmatprep.mubr.f32.mxu0 0.0
    %324 = vmatmul.mubr.f32.gmra.mxu0 %v42
    %v325 = vpop.f32.mrf.mxu0
    %v326 = vadd.f32 0.0, %v325
    %v327 = vpop.f32.mrf.mxu0
    %328 = vmatprep.mubr.f32.mxu0 0.0
    %329 = vmatmul.mubr.f32.gmra.mxu0 %v43
    %v330 = vpop.f32.mrf.mxu0
    %v331 = vadd.f32 0.0, %v330
    %v332 = vpop.f32.mrf.mxu0
    %333 = vmatprep.mubr.f32.mxu0 0.0
    %334 = vmatmul.mubr.f32.gmra.mxu0 %v44
    %v335 = vpop.f32.mrf.mxu0
    %v336 = vadd.f32 0.0, %v335
    %v337 = vpop.f32.mrf.mxu0
    %338 = vmatprep.mubr.f32.mxu0 0.0
    %339 = vmatmul.mubr.f32.gmra.mxu0 %v45
    %v340 = vpop.f32.mrf.mxu0
    %v341 = vadd.f32 0.0, %v340
    %v342 = vpop.f32.mrf.mxu0
    %343 = vmatprep.mubr.f32.mxu0 0.0
    %344 = vmatmul.mubr.f32.gmra.mxu0 %v46
    %v345 = vpop.f32.mrf.mxu0
    %v346 = vadd.f32 0.0, %v345
    %v347 = vpop.f32.mrf.mxu0
    %348 = vmatprep.mubr.f32.mxu0 0.0
    %349 = vmatmul.mubr.f32.gmra.mxu0 %v47
    %v350 = vpop.f32.mrf.mxu0
    %v351 = vadd.f32 0.0, %v350
    %v352 = vpop.f32.mrf.mxu0
    %353 = vmatprep.mubr.f32.mxu0 0.0
    %354 = vmatmul.mubr.f32.gmra.mxu0 %v48
    %v355 = vpop.f32.mrf.mxu0
    %v356 = vadd.f32 0.0, %v355
    %v357 = vpop.f32.mrf.mxu0
    %358 = vmatprep.mubr.f32.mxu0 0.0
    %359 = vmatmul.mubr.f32.gmra.mxu0 %v49
    %v360 = vpop.f32.mrf.mxu0
    %v361 = vadd.f32 0.0, %v360
    %v362 = vpop.f32.mrf.mxu0
    %363 = vmatprep.mubr.f32.mxu0 0.0
    %364 = vmatmul.mubr.f32.gmra.mxu0 %v50
    %v365 = vpop.f32.mrf.mxu0
    %v366 = vadd.f32 0.0, %v365
    %v367 = vpop.f32.mrf.mxu0
    %368 = vmatprep.mubr.f32.mxu0 0.0
    %369 = vmatmul.mubr.f32.gmra.mxu0 %v51
    %v370 = vpop.f32.mrf.mxu0
    %v371 = vadd.f32 0.0, %v370
    %v372 = vpop.f32.mrf.mxu0
    %373 = vmatprep.mubr.f32.mxu0 0.0
    %374 = vmatmul.mubr.f32.gmra.mxu0 %v52
    %v375 = vpop.f32.mrf.mxu0
    %v376 = vadd.f32 0.0, %v375
    %v377 = vpop.f32.mrf.mxu0
    %378 = vmatprep.mubr.f32.mxu0 0.0
    %379 = vmatmul.mubr.f32.gmra.mxu0 %v53
    %v380 = vpop.f32.mrf.mxu0
    %v381 = vadd.f32 0.0, %v380
    %v382 = vpop.f32.mrf.mxu0
    %383 = vmatprep.mubr.f32.mxu0 0.0
    %384 = vmatmul.mubr.f32.gmra.mxu0 %v54
    %v385 = vpop.f32.mrf.mxu0
    %v386 = vadd.f32 0.0, %v385
    %v387 = vpop.f32.mrf.mxu0
    %388 = vmatprep.mubr.f32.mxu0 0.0
    %389 = vmatmul.mubr.f32.gmra.mxu0 %v55
    %v390 = vpop.f32.mrf.mxu0
    %v391 = vadd.f32 0.0, %v390
    %v392 = vpop.f32.mrf.mxu0
    %393 = vdwg.mxu0
    %v394 = vmax.f32 %v316, 0.0
    %v395 = vmax.f32 %v321, 0.0
    %v396 = vmax.f32 %v326, 0.0
    %v397 = vmax.f32 %v331, 0.0
    %v398 = vmax.f32 %v336, 0.0
    %v399 = vmax.f32 %v341, 0.0
    %v400 = vmax.f32 %v346, 0.0
    %v401 = vmax.f32 %v351, 0.0
    %v402 = vmax.f32 %v356, 0.0
    %v403 = vmax.f32 %v361, 0.0
    %v404 = vmax.f32 %v366, 0.0
    %v405 = vmax.f32 %v371, 0.0
    %v406 = vmax.f32 %v376, 0.0
    %v407 = vmax.f32 %v381, 0.0
    %v408 = vmax.f32 %v386, 0.0
    %v409 = vmax.f32 %v391, 0.0
    %v410 = vmin.f32 %v394, 2.0
    %v411 = vmin.f32 %v395, 2.0
    %v412 = vmin.f32 %v396, 2.0
    %v413 = vmin.f32 %v397, 2.0
    %v414 = vmin.f32 %v398, 2.0
    %v415 = vmin.f32 %v399, 2.0
    %v416 = vmin.f32 %v400, 2.0
    %v417 = vmin.f32 %v401, 2.0
    %v418 = vmin.f32 %v402, 2.0
    %v419 = vmin.f32 %v403, 2.0
    %v420 = vmin.f32 %v404, 2.0
    %v421 = vmin.f32 %v405, 2.0
    %v422 = vmin.f32 %v406, 2.0
    %v423 = vmin.f32 %v407, 2.0
    %v424 = vmin.f32 %v408, 2.0
    %v425 = vmin.f32 %v409, 2.0
    %426 = vmatprep.subr.mxu0 0.0
    %427 = vmatpush1.msra.mxu0 %v425
    %428 = vmatprep.subr.mxu0 0.0
    %429 = vmatpush1.msra.mxu0 %v424
    %430 = vmatprep.subr.mxu0 0.0
    %431 = vmatpush1.msra.mxu0 %v423
    %432 = vmatprep.subr.mxu0 0.0
    %433 = vmatpush1.msra.mxu0 %v422
    %434 = vmatprep.subr.mxu0 0.0
    %435 = vmatpush1.msra.mxu0 %v421
    %436 = vmatprep.subr.mxu0 0.0
    %437 = vmatpush1.msra.mxu0 %v420
    %438 = vmatprep.subr.mxu0 0.0
    %439 = vmatpush1.msra.mxu0 %v419
    %440 = vmatprep.subr.mxu0 0.0
    %441 = vmatpush1.msra.mxu0 %v418
    %442 = vmatprep.subr.mxu0 0.0
    %443 = vmatpush1.msra.mxu0 %v417
    %444 = vmatprep.subr.mxu0 0.0
    %445 = vmatpush1.msra.mxu0 %v416
    %446 = vmatprep.subr.mxu0 0.0
    %447 = vmatpush1.msra.mxu0 %v415
    %448 = vmatprep.subr.mxu0 0.0
    %449 = vmatpush1.msra.mxu0 %v414
    %450 = vmatprep.subr.mxu0 0.0
    %451 = vmatpush1.msra.mxu0 %v413
    %452 = vmatprep.subr.mxu0 0.0
    %453 = vmatpush1.msra.mxu0 %v412
    %454 = vmatprep.subr.mxu0 0.0
    %455 = vmatpush1.msra.mxu0 %v411
    %456 = vmatprep.subr.mxu0 0.0
    %457 = vmatpush1.msra.mxu0 %v410
    %458 = vmatprep.subr.mxu0 0.0
    %459 = vmatpush2.msra.mxu0 0.0
    %460 = vmatprep.subr.mxu0 0.0
    %461 = vmatpush2.msra.mxu0 0.0
    %462 = vmatprep.subr.mxu0 0.0
    %463 = vmatpush2.msra.mxu0 0.0
    %464 = vmatprep.subr.mxu0 0.0
    %465 = vmatpush2.msra.mxu0 0.0
    %466 = vmatprep.subr.mxu0 0.0
    %467 = vmatpush2.msra.mxu0 0.0
    %468 = vmatprep.subr.mxu0 0.0
    %469 = vmatpush2.msra.mxu0 0.0
    %470 = vmatprep.subr.mxu0 0.0
    %471 = vmatpush2.msra.mxu0 0.0
    %472 = vmatprep.subr.mxu0 0.0
    %473 = vmatpush2.msra.mxu0 0.0
    %474 = vmatprep.subr.mxu0 0.0
    %475 = vmatpush2.msra.mxu0 0.0
    %476 = vmatprep.subr.mxu0 0.0
    %477 = vmatpush2.msra.mxu0 0.0
    %478 = vmatprep.subr.mxu0 0.0
    %479 = vmatpush2.msra.mxu0 0.0
    %480 = vmatprep.subr.mxu0 0.0
    %481 = vmatpush2.msra.mxu0 0.0
    %482 = vmatprep.subr.mxu0 0.0
    %483 = vmatpush2.msra.mxu0 0.0
    %484 = vmatprep.subr.mxu0 0.0
    %485 = vmatpush2.msra.mxu0 0.0
    %486 = vmatprep.subr.mxu0 0.0
    %487 = vmatpush2.msra.mxu0 0.0
    %488 = vmatprep.subr.mxu0 0.0
    %489 = vmatpush2.msra.mxu0 0.0
    %490 = vmatprep.mubr.f32.mxu0 0.0
    %491 = vmatmul.mubr.f32.gmra.mxu0 %v40
    %v492 = vpop.f32.mrf.mxu0
    %v493 = vadd.f32 0.0, %v492
    %v494 = vpop.f32.mrf.mxu0
    %495 = vmatprep.mubr.f32.mxu0 0.0
    %496 = vmatmul.mubr.f32.gmra.mxu0 %v41
    %v497 = vpop.f32.mrf.mxu0
    %v498 = vadd.f32 0.0, %v497
    %v499 = vpop.f32.mrf.mxu0
    %500 = vmatprep.mubr.f32.mxu0 0.0
    %501 = vmatmul.mubr.f32.gmra.mxu0 %v42
    %v502 = vpop.f32.mrf.mxu0
    %v503 = vadd.f32 0.0, %v502
    %v504 = vpop.f32.mrf.mxu0
    %505 = vmatprep.mubr.f32.mxu0 0.0
    %506 = vmatmul.mubr.f32.gmra.mxu0 %v43
    %v507 = vpop.f32.mrf.mxu0
    %v508 = vadd.f32 0.0, %v507
    %v509 = vpop.f32.mrf.mxu0
    %510 = vmatprep.mubr.f32.mxu0 0.0
    %511 = vmatmul.mubr.f32.gmra.mxu0 %v44
    %v512 = vpop.f32.mrf.mxu0
    %v513 = vadd.f32 0.0, %v512
    %v514 = vpop.f32.mrf.mxu0
    %515 = vmatprep.mubr.f32.mxu0 0.0
    %516 = vmatmul.mubr.f32.gmra.mxu0 %v45
    %v517 = vpop.f32.mrf.mxu0
    %v518 = vadd.f32 0.0, %v517
    %v519 = vpop.f32.mrf.mxu0
    %520 = vmatprep.mubr.f32.mxu0 0.0
    %521 = vmatmul.mubr.f32.gmra.mxu0 %v46
    %v522 = vpop.f32.mrf.mxu0
    %v523 = vadd.f32 0.0, %v522
    %v524 = vpop.f32.mrf.mxu0
    %525 = vmatprep.mubr.f32.mxu0 0.0
    %526 = vmatmul.mubr.f32.gmra.mxu0 %v47
    %v527 = vpop.f32.mrf.mxu0
    %v528 = vadd.f32 0.0, %v527
    %v529 = vpop.f32.mrf.mxu0
    %530 = vmatprep.mubr.f32.mxu0 0.0
    %531 = vmatmul.mubr.f32.gmra.mxu0 %v48
    %v532 = vpop.f32.mrf.mxu0
    %v533 = vadd.f32 0.0, %v532
    %v534 = vpop.f32.mrf.mxu0
    %535 = vmatprep.mubr.f32.mxu0 0.0
    %536 = vmatmul.mubr.f32.gmra.mxu0 %v49
    %v537 = vpop.f32.mrf.mxu0
    %v538 = vadd.f32 0.0, %v537
    %v539 = vpop.f32.mrf.mxu0
    %540 = vmatprep.mubr.f32.mxu0 0.0
    %541 = vmatmul.mubr.f32.gmra.mxu0 %v50
    %v542 = vpop.f32.mrf.mxu0
    %v543 = vadd.f32 0.0, %v542
    %v544 = vpop.f32.mrf.mxu0
    %545 = vmatprep.mubr.f32.mxu0 0.0
    %546 = vmatmul.mubr.f32.gmra.mxu0 %v51
    %v547 = vpop.f32.mrf.mxu0
    %v548 = vadd.f32 0.0, %v547
    %v549 = vpop.f32.mrf.mxu0
    %550 = vmatprep.mubr.f32.mxu0 0.0
    %551 = vmatmul.mubr.f32.gmra.mxu0 %v52
    %v552 = vpop.f32.mrf.mxu0
    %v553 = vadd.f32 0.0, %v552
    %v554 = vpop.f32.mrf.mxu0
    %555 = vmatprep.mubr.f32.mxu0 0.0
    %556 = vmatmul.mubr.f32.gmra.mxu0 %v53
    %v557 = vpop.f32.mrf.mxu0
    %v558 = vadd.f32 0.0, %v557
    %v559 = vpop.f32.mrf.mxu0
    %560 = vmatprep.mubr.f32.mxu0 0.0
    %561 = vmatmul.mubr.f32.gmra.mxu0 %v54
    %v562 = vpop.f32.mrf.mxu0
    %v563 = vadd.f32 0.0, %v562
    %v564 = vpop.f32.mrf.mxu0
    %565 = vmatprep.mubr.f32.mxu0 0.0
    %566 = vmatmul.mubr.f32.gmra.mxu0 %v55
    %v567 = vpop.f32.mrf.mxu0
    %v568 = vadd.f32 0.0, %v567
    %v569 = vpop.f32.mrf.mxu0
    %570 = vdwg.mxu0
    %v571 = vmax.f32 %v493, 0.0
    %v572 = vmax.f32 %v498, 0.0
    %v573 = vmax.f32 %v503, 0.0
    %v574 = vmax.f32 %v508, 0.0
    %v575 = vmax.f32 %v513, 0.0
    %v576 = vmax.f32 %v518, 0.0
    %v577 = vmax.f32 %v523, 0.0
    %v578 = vmax.f32 %v528, 0.0
    %v579 = vmax.f32 %v533, 0.0
    %v580 = vmax.f32 %v538, 0.0
    %v581 = vmax.f32 %v543, 0.0
    %v582 = vmax.f32 %v548, 0.0
    %v583 = vmax.f32 %v553, 0.0
    %v584 = vmax.f32 %v558, 0.0
    %v585 = vmax.f32 %v563, 0.0
    %v586 = vmax.f32 %v568, 0.0
    %v587 = vmin.f32 %v571, 2.0
    %v588 = vmin.f32 %v572, 2.0
    %v589 = vmin.f32 %v573, 2.0
    %v590 = vmin.f32 %v574, 2.0
    %v591 = vmin.f32 %v575, 2.0
    %v592 = vmin.f32 %v576, 2.0
    %v593 = vmin.f32 %v577, 2.0
    %v594 = vmin.f32 %v578, 2.0
    %v595 = vmin.f32 %v579, 2.0
    %v596 = vmin.f32 %v580, 2.0
    %v597 = vmin.f32 %v581, 2.0
    %v598 = vmin.f32 %v582, 2.0
    %v599 = vmin.f32 %v583, 2.0
    %v600 = vmin.f32 %v584, 2.0
    %v601 = vmin.f32 %v585, 2.0
    %v602 = vmin.f32 %v586, 2.0
    %603 = vmatprep.subr.mxu0 0.0
    %604 = vmatpush1.msra.mxu0 %v602
    %605 = vmatprep.subr.mxu0 0.0
    %606 = vmatpush1.msra.mxu0 %v601
    %607 = vmatprep.subr.mxu0 0.0
    %608 = vmatpush1.msra.mxu0 %v600
    %609 = vmatprep.subr.mxu0 0.0
    %610 = vmatpush1.msra.mxu0 %v599
    %611 = vmatprep.subr.mxu0 0.0
    %612 = vmatpush1.msra.mxu0 %v598
    %613 = vmatprep.subr.mxu0 0.0
    %614 = vmatpush1.msra.mxu0 %v597
    %615 = vmatprep.subr.mxu0 0.0
    %616 = vmatpush1.msra.mxu0 %v596
    %617 = vmatprep.subr.mxu0 0.0
    %618 = vmatpush1.msra.mxu0 %v595
    %619 = vmatprep.subr.mxu0 0.0
    %620 = vmatpush1.msra.mxu0 %v594
    %621 = vmatprep.subr.mxu0 0.0
    %622 = vmatpush1.msra.mxu0 %v593
    %623 = vmatprep.subr.mxu0 0.0
    %624 = vmatpush1.msra.mxu0 %v592
    %625 = vmatprep.subr.mxu0 0.0
    %626 = vmatpush1.msra.mxu0 %v591
    %627 = vmatprep.subr.mxu0 0.0
    %628 = vmatpush1.msra.mxu0 %v590
    %629 = vmatprep.subr.mxu0 0.0
    %630 = vmatpush1.msra.mxu0 %v589
    %631 = vmatprep.subr.mxu0 0.0
    %632 = vmatpush1.msra.mxu0 %v588
    %633 = vmatprep.subr.mxu0 0.0
    %634 = vmatpush1.msra.mxu0 %v587
    %635 = vmatprep.subr.mxu0 0.0
    %636 = vmatpush2.msra.mxu0 0.0
    %637 = vmatprep.subr.mxu0 0.0
    %638 = vmatpush2.msra.mxu0 0.0
    %639 = vmatprep.subr.mxu0 0.0
    %640 = vmatpush2.msra.mxu0 0.0
    %641 = vmatprep.subr.mxu0 0.0
    %642 = vmatpush2.msra.mxu0 0.0
    %643 = vmatprep.subr.mxu0 0.0
    %644 = vmatpush2.msra.mxu0 0.0
    %645 = vmatprep.subr.mxu0 0.0
    %646 = vmatpush2.msra.mxu0 0.0
    %647 = vmatprep.subr.mxu0 0.0
    %648 = vmatpush2.msra.mxu0 0.0
    %649 = vmatprep.subr.mxu0 0.0
    %650 = vmatpush2.msra.mxu0 0.0
    %651 = vmatprep.subr.mxu0 0.0
    %652 = vmatpush2.msra.mxu0 0.0
    %653 = vmatprep.subr.mxu0 0.0
    %654 = vmatpush2.msra.mxu0 0.0
    %655 = vmatprep.subr.mxu0 0.0
    %656 = vmatpush2.msra.mxu0 0.0
    %657 = vmatprep.subr.mxu0 0.0
    %658 = vmatpush2.msra.mxu0 0.0
    %659 = vmatprep.subr.mxu0 0.0
    %660 = vmatpush2.msra.mxu0 0.0
    %661 = vmatprep.subr.mxu0 0.0
    %662 = vmatpush2.msra.mxu0 0.0
    %663 = vmatprep.subr.mxu0 0.0
    %664 = vmatpush2.msra.mxu0 0.0
    %665 = vmatprep.subr.mxu0 0.0
    %666 = vmatpush2.msra.mxu0 0.0
    %667 = vmatprep.mubr.f32.mxu0 0.0
    %668 = vmatmul.mubr.f32.gmra.mxu0 %v40
    %v669 = vpop.f32.mrf.mxu0
    %v670 = vadd.f32 0.0, %v669
    %v671 = vpop.f32.mrf.mxu0
    %672 = vmatprep.mubr.f32.mxu0 0.0
    %673 = vmatmul.mubr.f32.gmra.mxu0 %v41
    %v674 = vpop.f32.mrf.mxu0
    %v675 = vadd.f32 0.0, %v674
    %v676 = vpop.f32.mrf.mxu0
    %677 = vmatprep.mubr.f32.mxu0 0.0
    %678 = vmatmul.mubr.f32.gmra.mxu0 %v42
    %v679 = vpop.f32.mrf.mxu0
    %v680 = vadd.f32 0.0, %v679
    %v681 = vpop.f32.mrf.mxu0
    %682 = vmatprep.mubr.f32.mxu0 0.0
    %683 = vmatmul.mubr.f32.gmra.mxu0 %v43
    %v684 = vpop.f32.mrf.mxu0
    %v685 = vadd.f32 0.0, %v684
    %v686 = vpop.f32.mrf.mxu0
    %687 = vmatprep.mubr.f32.mxu0 0.0
    %688 = vmatmul.mubr.f32.gmra.mxu0 %v44
    %v689 = vpop.f32.mrf.mxu0
    %v690 = vadd.f32 0.0, %v689
    %v691 = vpop.f32.mrf.mxu0
    %692 = vmatprep.mubr.f32.mxu0 0.0
    %693 = vmatmul.mubr.f32.gmra.mxu0 %v45
    %v694 = vpop.f32.mrf.mxu0
    %v695 = vadd.f32 0.0, %v694
    %v696 = vpop.f32.mrf.mxu0
    %697 = vmatprep.mubr.f32.mxu0 0.0
    %698 = vmatmul.mubr.f32.gmra.mxu0 %v46
    %v699 = vpop.f32.mrf.mxu0
    %v700 = vadd.f32 0.0, %v699
    %v701 = vpop.f32.mrf.mxu0
    %702 = vmatprep.mubr.f32.mxu0 0.0
    %703 = vmatmul.mubr.f32.gmra.mxu0 %v47
    %v704 = vpop.f32.mrf.mxu0
    %v705 = vadd.f32 0.0, %v704
    %v706 = vpop.f32.mrf.mxu0
    %707 = vmatprep.mubr.f32.mxu0 0.0
    %708 = vmatmul.mubr.f32.gmra.mxu0 %v48
    %v709 = vpop.f32.mrf.mxu0
    %v710 = vadd.f32 0.0, %v709
    %v711 = vpop.f32.mrf.mxu0
    %712 = vmatprep.mubr.f32.mxu0 0.0
    %713 = vmatmul.mubr.f32.gmra.mxu0 %v49
    %v714 = vpop.f32.mrf.mxu0
    %v715 = vadd.f32 0.0, %v714
    %v716 = vpop.f32.mrf.mxu0
    %717 = vmatprep.mubr.f32.mxu0 0.0
    %718 = vmatmul.mubr.f32.gmra.mxu0 %v50
    %v719 = vpop.f32.mrf.mxu0
    %v720 = vadd.f32 0.0, %v719
    %v721 = vpop.f32.mrf.mxu0
    %722 = vmatprep.mubr.f32.mxu0 0.0
    %723 = vmatmul.mubr.f32.gmra.mxu0 %v51
    %v724 = vpop.f32.mrf.mxu0
    %v725 = vadd.f32 0.0, %v724
    %v726 = vpop.f32.mrf.mxu0
    %727 = vmatprep.mubr.f32.mxu0 0.0
    %728 = vmatmul.mubr.f32.gmra.mxu0 %v52
    %v729 = vpop.f32.mrf.mxu0
    %v730 = vadd.f32 0.0, %v729
    %v731 = vpop.f32.mrf.mxu0
    %732 = vmatprep.mubr.f32.mxu0 0.0
    %733 = vmatmul.mubr.f32.gmra.mxu0 %v53
    %v734 = vpop.f32.mrf.mxu0
    %v735 = vadd.f32 0.0, %v734
    %v736 = vpop.f32.mrf.mxu0
    %737 = vmatprep.mubr.f32.mxu0 0.0
    %738 = vmatmul.mubr.f32.gmra.mxu0 %v54
    %v739 = vpop.f32.mrf.mxu0
    %v740 = vadd.f32 0.0, %v739
    %v741 = vpop.f32.mrf.mxu0
    %742 = vmatprep.mubr.f32.mxu0 0.0
    %743 = vmatmul.mubr.f32.gmra.mxu0 %v55
    %v744 = vpop.f32.mrf.mxu0
    %v745 = vadd.f32 0.0, %v744
    %v746 = vpop.f32.mrf.mxu0
    %747 = vdwg.mxu0
    %v748 = vmax.f32 %v670, 0.0
    %v749 = vmax.f32 %v675, 0.0
    %v750 = vmax.f32 %v680, 0.0
    %v751 = vmax.f32 %v685, 0.0
    %v752 = vmax.f32 %v690, 0.0
    %v753 = vmax.f32 %v695, 0.0
    %v754 = vmax.f32 %v700, 0.0
    %v755 = vmax.f32 %v705, 0.0
    %v756 = vmax.f32 %v710, 0.0
    %v757 = vmax.f32 %v715, 0.0
    %v758 = vmax.f32 %v720, 0.0
    %v759 = vmax.f32 %v725, 0.0
    %v760 = vmax.f32 %v730, 0.0
    %v761 = vmax.f32 %v735, 0.0
    %v762 = vmax.f32 %v740, 0.0
    %v763 = vmax.f32 %v745, 0.0
    %v764 = vmin.f32 %v748, 2.0
    %v765 = vmin.f32 %v749, 2.0
    %v766 = vmin.f32 %v750, 2.0
    %v767 = vmin.f32 %v751, 2.0
    %v768 = vmin.f32 %v752, 2.0
    %v769 = vmin.f32 %v753, 2.0
    %v770 = vmin.f32 %v754, 2.0
    %v771 = vmin.f32 %v755, 2.0
    %v772 = vmin.f32 %v756, 2.0
    %v773 = vmin.f32 %v757, 2.0
    %v774 = vmin.f32 %v758, 2.0
    %v775 = vmin.f32 %v759, 2.0
    %v776 = vmin.f32 %v760, 2.0
    %v777 = vmin.f32 %v761, 2.0
    %v778 = vmin.f32 %v762, 2.0
    %v779 = vmin.f32 %v763, 2.0
    %780 = vmatprep.subr.mxu0 0.0
    %781 = vmatpush1.msra.mxu0 %v779
    %782 = vmatprep.subr.mxu0 0.0
    %783 = vmatpush1.msra.mxu0 %v778
    %784 = vmatprep.subr.mxu0 0.0
    %785 = vmatpush1.msra.mxu0 %v777
    %786 = vmatprep.subr.mxu0 0.0
    %787 = vmatpush1.msra.mxu0 %v776
    %788 = vmatprep.subr.mxu0 0.0
    %789 = vmatpush1.msra.mxu0 %v775
    %790 = vmatprep.subr.mxu0 0.0
    %791 = vmatpush1.msra.mxu0 %v774
    %792 = vmatprep.subr.mxu0 0.0
    %793 = vmatpush1.msra.mxu0 %v773
    %794 = vmatprep.subr.mxu0 0.0
    %795 = vmatpush1.msra.mxu0 %v772
    %796 = vmatprep.subr.mxu0 0.0
    %797 = vmatpush1.msra.mxu0 %v771
    %798 = vmatprep.subr.mxu0 0.0
    %799 = vmatpush1.msra.mxu0 %v770
    %800 = vmatprep.subr.mxu0 0.0
    %801 = vmatpush1.msra.mxu0 %v769
    %802 = vmatprep.subr.mxu0 0.0
    %803 = vmatpush1.msra.mxu0 %v768
    %804 = vmatprep.subr.mxu0 0.0
    %805 = vmatpush1.msra.mxu0 %v767
    %806 = vmatprep.subr.mxu0 0.0
    %807 = vmatpush1.msra.mxu0 %v766
    %808 = vmatprep.subr.mxu0 0.0
    %809 = vmatpush1.msra.mxu0 %v765
    %810 = vmatprep.subr.mxu0 0.0
    %811 = vmatpush1.msra.mxu0 %v764
    %812 = vmatprep.subr.mxu0 0.0
    %813 = vmatpush2.msra.mxu0 0.0
    %814 = vmatprep.subr.mxu0 0.0
    %815 = vmatpush2.msra.mxu0 0.0
    %816 = vmatprep.subr.mxu0 0.0
    %817 = vmatpush2.msra.mxu0 0.0
    %818 = vmatprep.subr.mxu0 0.0
    %819 = vmatpush2.msra.mxu0 0.0
    %820 = vmatprep.subr.mxu0 0.0
    %821 = vmatpush2.msra.mxu0 0.0
    %822 = vmatprep.subr.mxu0 0.0
    %823 = vmatpush2.msra.mxu0 0.0
    %824 = vmatprep.subr.mxu0 0.0
    %825 = vmatpush2.msra.mxu0 0.0
    %826 = vmatprep.subr.mxu0 0.0
    %827 = vmatpush2.msra.mxu0 0.0
    %828 = vmatprep.subr.mxu0 0.0
    %829 = vmatpush2.msra.mxu0 0.0
    %830 = vmatprep.subr.mxu0 0.0
    %831 = vmatpush2.msra.mxu0 0.0
    %832 = vmatprep.subr.mxu0 0.0
    %833 = vmatpush2.msra.mxu0 0.0
    %834 = vmatprep.subr.mxu0 0.0
    %835 = vmatpush2.msra.mxu0 0.0
    %836 = vmatprep.subr.mxu0 0.0
    %837 = vmatpush2.msra.mxu0 0.0
    %838 = vmatprep.subr.mxu0 0.0
    %839 = vmatpush2.msra.mxu0 0.0
    %840 = vmatprep.subr.mxu0 0.0
    %841 = vmatpush2.msra.mxu0 0.0
    %842 = vmatprep.subr.mxu0 0.0
    %843 = vmatpush2.msra.mxu0 0.0
    %844 = vmatprep.mubr.f32.mxu0 0.0
    %845 = vmatmul.mubr.f32.gmra.mxu0 %v40
    %v846 = vpop.f32.mrf.mxu0
    %v847 = vadd.f32 0.0, %v846
    %v848 = vpop.f32.mrf.mxu0
    %849 = vmatprep.mubr.f32.mxu0 0.0
    %850 = vmatmul.mubr.f32.gmra.mxu0 %v41
    %v851 = vpop.f32.mrf.mxu0
    %v852 = vadd.f32 0.0, %v851
    %v853 = vpop.f32.mrf.mxu0
    %854 = vmatprep.mubr.f32.mxu0 0.0
    %855 = vmatmul.mubr.f32.gmra.mxu0 %v42
    %v856 = vpop.f32.mrf.mxu0
    %v857 = vadd.f32 0.0, %v856
    %v858 = vpop.f32.mrf.mxu0
    %859 = vmatprep.mubr.f32.mxu0 0.0
    %860 = vmatmul.mubr.f32.gmra.mxu0 %v43
    %v861 = vpop.f32.mrf.mxu0
    %v862 = vadd.f32 0.0, %v861
    %v863 = vpop.f32.mrf.mxu0
    %864 = vmatprep.mubr.f32.mxu0 0.0
    %865 = vmatmul.mubr.f32.gmra.mxu0 %v44
    %v866 = vpop.f32.mrf.mxu0
    %v867 = vadd.f32 0.0, %v866
    %v868 = vpop.f32.mrf.mxu0
    %869 = vmatprep.mubr.f32.mxu0 0.0
    %870 = vmatmul.mubr.f32.gmra.mxu0 %v45
    %v871 = vpop.f32.mrf.mxu0
    %v872 = vadd.f32 0.0, %v871
    %v873 = vpop.f32.mrf.mxu0
    %874 = vmatprep.mubr.f32.mxu0 0.0
    %875 = vmatmul.mubr.f32.gmra.mxu0 %v46
    %v876 = vpop.f32.mrf.mxu0
    %v877 = vadd.f32 0.0, %v876
    %v878 = vpop.f32.mrf.mxu0
    %879 = vmatprep.mubr.f32.mxu0 0.0
    %880 = vmatmul.mubr.f32.gmra.mxu0 %v47
    %v881 = vpop.f32.mrf.mxu0
    %v882 = vadd.f32 0.0, %v881
    %v883 = vpop.f32.mrf.mxu0
    %884 = vmatprep.mubr.f32.mxu0 0.0
    %885 = vmatmul.mubr.f32.gmra.mxu0 %v48
    %v886 = vpop.f32.mrf.mxu0
    %v887 = vadd.f32 0.0, %v886
    %v888 = vpop.f32.mrf.mxu0
    %889 = vmatprep.mubr.f32.mxu0 0.0
    %890 = vmatmul.mubr.f32.gmra.mxu0 %v49
    %v891 = vpop.f32.mrf.mxu0
    %v892 = vadd.f32 0.0, %v891
    %v893 = vpop.f32.mrf.mxu0
    %894 = vmatprep.mubr.f32.mxu0 0.0
    %895 = vmatmul.mubr.f32.gmra.mxu0 %v50
    %v896 = vpop.f32.mrf.mxu0
    %v897 = vadd.f32 0.0, %v896
    %v898 = vpop.f32.mrf.mxu0
    %899 = vmatprep.mubr.f32.mxu0 0.0
    %900 = vmatmul.mubr.f32.gmra.mxu0 %v51
    %v901 = vpop.f32.mrf.mxu0
    %v902 = vadd.f32 0.0, %v901
    %v903 = vpop.f32.mrf.mxu0
    %904 = vmatprep.mubr.f32.mxu0 0.0
    %905 = vmatmul.mubr.f32.gmra.mxu0 %v52
    %v906 = vpop.f32.mrf.mxu0
    %v907 = vadd.f32 0.0, %v906
    %v908 = vpop.f32.mrf.mxu0
    %909 = vmatprep.mubr.f32.mxu0 0.0
    %910 = vmatmul.mubr.f32.gmra.mxu0 %v53
    %v911 = vpop.f32.mrf.mxu0
    %v912 = vadd.f32 0.0, %v911
    %v913 = vpop.f32.mrf.mxu0
    %914 = vmatprep.mubr.f32.mxu0 0.0
    %915 = vmatmul.mubr.f32.gmra.mxu0 %v54
    %v916 = vpop.f32.mrf.mxu0
    %v917 = vadd.f32 0.0, %v916
    %v918 = vpop.f32.mrf.mxu0
    %919 = vmatprep.mubr.f32.mxu0 0.0
    %920 = vmatmul.mubr.f32.gmra.mxu0 %v55
    %v921 = vpop.f32.mrf.mxu0
    %v922 = vadd.f32 0.0, %v921
    %v923 = vpop.f32.mrf.mxu0
    %924 = vdwg.mxu0
    %v925 = vmax.f32 %v847, 0.0
    %v926 = vmax.f32 %v852, 0.0
    %v927 = vmax.f32 %v857, 0.0
    %v928 = vmax.f32 %v862, 0.0
    %v929 = vmax.f32 %v867, 0.0
    %v930 = vmax.f32 %v872, 0.0
    %v931 = vmax.f32 %v877, 0.0
    %v932 = vmax.f32 %v882, 0.0
    %v933 = vmax.f32 %v887, 0.0
    %v934 = vmax.f32 %v892, 0.0
    %v935 = vmax.f32 %v897, 0.0
    %v936 = vmax.f32 %v902, 0.0
    %v937 = vmax.f32 %v907, 0.0
    %v938 = vmax.f32 %v912, 0.0
    %v939 = vmax.f32 %v917, 0.0
    %v940 = vmax.f32 %v922, 0.0
    %v941 = vmin.f32 %v925, 2.0
    %v942 = vmin.f32 %v926, 2.0
    %v943 = vmin.f32 %v927, 2.0
    %v944 = vmin.f32 %v928, 2.0
    %v945 = vmin.f32 %v929, 2.0
    %v946 = vmin.f32 %v930, 2.0
    %v947 = vmin.f32 %v931, 2.0
    %v948 = vmin.f32 %v932, 2.0
    %v949 = vmin.f32 %v933, 2.0
    %v950 = vmin.f32 %v934, 2.0
    %v951 = vmin.f32 %v935, 2.0
    %v952 = vmin.f32 %v936, 2.0
    %v953 = vmin.f32 %v937, 2.0
    %v954 = vmin.f32 %v938, 2.0
    %v955 = vmin.f32 %v939, 2.0
    %v956 = vmin.f32 %v940, 2.0
    %957 = vst [vmem:[#allocation7] sm:$0xff] %v941
    %958 = vst [vmem:[#allocation7 + $0x8] sm:$0xff] %v942
    %959 = vst [vmem:[#allocation7 + $0x10] sm:$0xff] %v943
    %960 = vst [vmem:[#allocation7 + $0x18] sm:$0xff] %v944
    %961 = vst [vmem:[#allocation7 + $0x20] sm:$0xff] %v945
    %962 = vst [vmem:[#allocation7 + $0x28] sm:$0xff] %v946
    %963 = vst [vmem:[#allocation7 + $0x30] sm:$0xff] %v947
    %964 = vst [vmem:[#allocation7 + $0x38] sm:$0xff] %v948
    %965 = vst [vmem:[#allocation7 + $0x40] sm:$0xff] %v949
    %966 = vst [vmem:[#allocation7 + $0x48] sm:$0xff] %v950
    %967 = vst [vmem:[#allocation7 + $0x50] sm:$0xff] %v951
    %968 = vst [vmem:[#allocation7 + $0x58] sm:$0xff] %v952
    %969 = vst [vmem:[#allocation7 + $0x60] sm:$0xff] %v953
    %970 = vst [vmem:[#allocation7 + $0x68] sm:$0xff] %v954
    %971 = vst [vmem:[#allocation7 + $0x70] sm:$0xff] %v955
    %972 = vst [vmem:[#allocation7 + $0x78] sm:$0xff] %v956
    // Predicated region
    $region18: #{tpu_custom_call.1} parent=1 // pred_check
      _
    $region19: #{tpu_custom_call.1} parent=1 // pred_check_branch
      %974 = sbr.rel (0) target = $region21
    $region20: #{tpu_custom_call.1} parent=1 // pred_region
      %s976 = ssub.s32 2048, 2048
      %977 = vsyncadd [#allocation4], %s976
      %s978 = sshll.u32 [#allocation7], 4
      %s979 = int_to_ptr.vmem [resolvable:$true] %s978
      %984 = dma.vmem_to_hbm [thread:$0]  %s979, 2048, %s2, [#allocation4], 128, 128, 8
    $region21: #{tpu_custom_call.1} parent=1 // pred_fallthru
      _
    // Predicated region
    $region22: #{tpu_custom_call.1} parent=1 // pred_check
      _
    $region23: #{tpu_custom_call.1} parent=1 // pred_check_branch
      %986 = sbr.rel (0) target = $region25
    $region24: #{tpu_custom_call.1} parent=1 // pred_region
      %987 = dma.done [#allocation4], 2048
    $region25: #{tpu_custom_call.1} parent=1 // pred_fallthru
      _
    %988 = vsyncpa [#allocation3], 1
    %989 = vsyncpa [#allocation6], 1
    %990 = vsyncpa [#allocation4], 1

</llo_original>
